<compile_context>
chip_gen: v7x
topology: tpu7x:2x2x1
jax: 0.10.0
libtpu: 0.0.40
codegen_flags: <defaults>
</compile_context>

<pallas_src>
import functools

import jax
import jax.numpy as jnp
from jax import lax
from jax.experimental import pallas as pl
from jax.experimental.pallas import tpu as pltpu


_LANE = 128
_LANE_CHUNK = 512                      # lanes per fori_loop step (register-resident sums)
_SCORE_BLOCK_BYTES = 4 * 1024 * 1024   # per-tile score bytes (2-4 MiB sweet spot)


def _dice_partial_kernel(score_ref, tgt_ref, out_ref, acc_ref, *,
                         n_classes, tile_n, lane_chunk, n_valid, n_tiles,
                         apply_softmax, ragged, has_pad_tiles):
    # score_ref: (1, C, tile_n)    native dtype (f32/bf16), VMEM
    # tgt_ref:   (1, 1, tile_n)    int32 labels, VMEM
    # out_ref:   (1, 1, 3, C)      f32, resident across the pixel-tile axis
    # acc_ref:   (3, C, lane_chunk) f32 scratch, persists across pixel tiles
    c = pl.program_id(1)               # megacore split axis (parallel)
    n = pl.program_id(2)               # pixel-tile axis (innermost, arbitrary)
    n_inner = pl.num_programs(2)
    gtile = c * n_inner + n            # global pixel-tile index

    @pl.when(n == 0)
    def _():
        acc_ref[...] = jnp.zeros_like(acc_ref)

    num_chunks = tile_n // lane_chunk

    def chunk_partials(start, masked):
        s = score_ref[0, :, pl.ds(start, lane_chunk)].astype(jnp.float32)   # (C, chunk)
        lbl = tgt_ref[0, :, pl.ds(start, lane_chunk)]                       # (1, chunk)
        if apply_softmax:
            m = jnp.max(s, axis=0, keepdims=True)
            e = jnp.exp(s - m)
            p = e * pl.reciprocal(jnp.sum(e, axis=0, keepdims=True), approx=False)
        else:
            p = s
        cls = lax.broadcasted_iota(jnp.int32, (n_classes, lane_chunk), 0)
        t = (lbl == cls).astype(jnp.float32)                                # (C, chunk)
        if masked:
            pix = (gtile * tile_n + start
                   + lax.broadcasted_iota(jnp.int32, (1, lane_chunk), 1))
            valid = pix < n_valid
            p = jnp.where(valid, p, 0.0)
            t = jnp.where(valid, t, 0.0)
        # t*t == t for one-hot targets.
        return p * t, t, p * p

    def accumulate(masked):
        if num_chunks == 1:
            ai, ay, az = chunk_partials(0, masked)
        else:
            def body(i, carry):
                start = pl.multiple_of(i * lane_chunk, lane_chunk)
                di, dy, dz = chunk_partials(start, masked)
                return carry[0] + di, carry[1] + dy, carry[2] + dz
            zero = jnp.zeros((n_classes, lane_chunk), jnp.float32)
            ai, ay, az = lax.fori_loop(0, num_chunks, body, (zero, zero, zero))
        # One small RMW per tile (instead of per vreg).
        acc_ref[0] += ai
        acc_ref[1] += ay
        acc_ref[2] += az

    if ragged:
        if n_tiles > 1:
            @pl.when(gtile < n_tiles - 1)
            def _():
                accumulate(False)

        @pl.when(gtile == n_tiles - 1)
        def _():
            accumulate(True)
    else:
        if has_pad_tiles:
            @pl.when(gtile < n_tiles)
            def _():
                accumulate(False)
        else:
            accumulate(False)

    @pl.when(n == n_inner - 1)
    def _():
        # Single deferred cross-lane (XLU) reduction per (batch, split).
        out_ref[0, 0] = jnp.sum(acc_ref[...], axis=-1)   # (3, C)


@functools.partial(jax.jit, static_argnames=("n_classes", "softmax"))
def dice_loss(inputs, target, n_classes, weight=None, softmax=False):
    """Matches DiceLoss.forward: inputs (B,C,H,W) float, target (B,H,W) int."""
    B, C, H, W = inputs.shape
    assert C == n_classes
    assert target.shape == (B, H, W)
    N = H * W

    # Native layout / native dtype, free reshapes, no wrapper pad or f32 cast.
    scores = inputs.reshape(B, C, N)
    tgt = target.reshape(B, 1, N).astype(jnp.int32)

    itemsize = jnp.dtype(scores.dtype).itemsize
    budget_lanes = max(_LANE, (_SCORE_BLOCK_BYTES // (itemsize * C)) // _LANE * _LANE)
    n_pad_128 = pl.cdiv(N, _LANE) * _LANE
    tile_n = min(budget_lanes, n_pad_128)
    if tile_n >= _LANE_CHUNK:
        tile_n = (tile_n // _LANE_CHUNK) * _LANE_CHUNK
        lane_chunk = _LANE_CHUNK
    else:
        lane_chunk = tile_n                       # single chunk, multiple of 128
    n_tiles = pl.cdiv(N, tile_n)
    ragged = (N % tile_n) != 0

    # v7x megacore: ensure a >=2-wide parallel axis when B is odd (e.g. B==1)
    # by splitting the pixel-tile axis into an outer parallel factor of 2.
    split = 2 if (B % 2 == 1 and n_tiles >= 2) else 1
    n_inner = pl.cdiv(n_tiles, split)
    has_pad_tiles = split * n_inner > n_tiles
    last_tile = n_tiles - 1

    def tile_idx(c, n):
        # Clamp so the (rare) padding tile re-reads the last valid tile; its
        # contribution is skipped in-kernel.
        return jnp.minimum(c * n_inner + n, last_tile)

    kernel = functools.partial(
        _dice_partial_kernel,
        n_classes=n_classes, tile_n=tile_n, lane_chunk=lane_chunk,
        n_valid=N, n_tiles=n_tiles, apply_softmax=bool(softmax),
        ragged=ragged, has_pad_tiles=has_pad_tiles)

    # per_part[b, c] = [intersect_k, y_sum_k, z_sum_k] over that slice's pixels.
    per_part = pl.pallas_call(
        kernel,
        out_shape=jax.ShapeDtypeStruct((B, split, 3, C), jnp.float32),
        grid_spec=pltpu.PrefetchScalarGridSpec(
            num_scalar_prefetch=0,
            grid=(B, split, n_inner),
            in_specs=[
                pl.BlockSpec((1, C, tile_n), lambda b, c, n: (b, 0, tile_idx(c, n))),
                pl.BlockSpec((1, 1, tile_n), lambda b, c, n: (b, 0, tile_idx(c, n))),
            ],
            out_specs=pl.BlockSpec((1, 1, 3, C), lambda b, c, n: (b, c, 0, 0)),
            scratch_shapes=[pltpu.VMEM((3, C, lane_chunk), jnp.float32)],
        ),
        compiler_params=pltpu.CompilerParams(
            dimension_semantics=("parallel", "parallel", "arbitrary"),
            vmem_limit_bytes=32 * 1024 * 1024),
    )(scores, tgt)

    # Tiny O(B*C) epilogue: fold in smooth / weight / mean (PyTorch computes
    # each class's dice over the whole batch).
    totals = jnp.sum(per_part, axis=(0, 1))          # (3, C)
    smooth = jnp.float32(1e-05)
    intersect, y_sum, z_sum = totals[0], totals[1], totals[2]
    dice = 1.0 - (2.0 * intersect + smooth) / (z_sum + y_sum + smooth)

    if weight is None:
        weight = jnp.ones((n_classes,), jnp.float32)
    else:
        weight = jnp.asarray(weight, jnp.float32)
    return jnp.sum(dice * weight) / n_classes


def _dice_loss_ref(inputs, target, n_classes, weight=None, softmax=False):
    """Pure-JAX reference mirroring the PyTorch module."""
    if softmax:
        x = jax.nn.softmax(inputs.astype(jnp.float32), axis=1)
    else:
        x = inputs.astype(jnp.float32)
    onehot = jax.nn.one_hot(target, n_classes, dtype=jnp.float32)   # (B,H,W,C)
    onehot = jnp.transpose(onehot, (0, 3, 1, 2))                    # (B,C,H,W)
    if weight is None:
        weight = [1.0] * n_classes
    smooth = 1e-05
    loss = 0.0
    for i in range(n_classes):
        s, t = x[:, i], onehot[:, i]
        intersect = jnp.sum(s * t)
        y_sum = jnp.sum(t * t)
        z_sum = jnp.sum(s * s)
        dice = 1.0 - (2.0 * intersect + smooth) / (z_sum + y_sum + smooth)
        loss = loss + dice * weight[i]
    return loss / n_classes


if __name__ == "__main__":
    B, C, H, W = 2, 4, 16, 16
    key = jax.random.PRNGKey(0)
    k_in, k_tg = jax.random.split(key)
    inputs = jax.random.normal(k_in, (B, C, H, W), dtype=jnp.float32)
    target = jax.random.randint(k_tg, (B, H, W), 0, C, dtype=jnp.int32)

    # Typical usage: softmax=True, default weight.
    out = jax.block_until_ready(dice_loss(inputs, target, n_classes=C, softmax=True))
    ref = _dice_loss_ref(inputs, target, n_classes=C, softmax=True)
    assert jnp.allclose(out, ref, rtol=1e-5, atol=1e-5), (out, ref)

    # softmax=False / explicit-weight path.
    w = [0.5, 1.0, 1.5, 2.0]
    out2 = jax.block_until_ready(
        dice_loss(inputs, target, n_classes=C, weight=w, softmax=False))
    ref2 = _dice_loss_ref(inputs, target, n_classes=C, weight=w, softmax=False)
    assert jnp.allclose(out2, ref2, rtol=1e-5, atol=1e-5), (out2, ref2)

    # Ragged pixel count (B=1, N not a multiple of 128): exercises the
    # in-kernel tail masking of both p and t.
    H2, W2 = 12, 12
    inputs3 = jax.random.normal(k_in, (1, C, H2, W2), dtype=jnp.float32)
    target3 = jax.random.randint(k_tg, (1, H2, W2), 0, C, dtype=jnp.int32)
    out3 = jax.block_until_ready(dice_loss(inputs3, target3, n_classes=C, softmax=True))
    ref3 = _dice_loss_ref(inputs3, target3, n_classes=C, softmax=True)
    assert jnp.allclose(out3, ref3, rtol=1e-5, atol=1e-5), (out3, ref3)

    print("KERNEL_OK")
</pallas_src>

<mosaic_0001>
module attributes {stable_mosaic.version = 11 : i64} {
  func.func @_dice_partial_kernel(%arg0: i32, %arg1: i32, %arg2: i32, %arg3: memref<1x4x256xf32, #tpu.memory_space<vmem>>, %arg4: memref<1x1x256xi32, #tpu.memory_space<vmem>>, %arg5: memref<1x1x3x4xf32, #tpu.memory_space<vmem>>, %arg6: memref<3x4x256xf32, #tpu.memory_space<vmem>>) attributes {dimension_semantics = [#tpu.dimension_semantics<parallel>, #tpu.dimension_semantics<parallel>, #tpu.dimension_semantics<arbitrary>], iteration_bounds = array<i64: 2, 1, 1>, scalar_prefetch = 0 : i64, scratch_operands = 1 : i64, tpu.core_type = #tpu.core_type<tc>, window_params = [{transform_indices = @transform_0, window_bounds = array<i64: 1, 4, 256>}, {transform_indices = @transform_1, window_bounds = array<i64: 1, 1, 256>}, {transform_indices = @transform_2, window_bounds = array<i64: 1, 1, 3, 4>}]} {
    %c0_i32 = arith.constant 0 : i32
    %0 = arith.cmpi eq, %arg2, %c0_i32 : i32
    %1 = arith.extui %0 : i1 to i32
    %c0_i32_0 = arith.constant 0 : i32
    %2 = arith.cmpi ne, %1, %c0_i32_0 : i32
    scf.if %2 {
      %cst_25 = arith.constant 0.000000e+00 : f32
      %45 = vector.broadcast %cst_25 : f32 to vector<3x4x256xf32>
      %c0_26 = arith.constant 0 : index
      %c0_27 = arith.constant 0 : index
      %c0_28 = arith.constant 0 : index
      %46 = vector.load %arg6[%c0_26, %c0_27, %c0_28] : memref<3x4x256xf32, #tpu.memory_space<vmem>>, vector<3x4x256xf32>
      tpu.vector_store %arg6[%c0_26, %c0_27, %c0_28], %45 {strides = array<i32>} : memref<3x4x256xf32, #tpu.memory_space<vmem>>, vector<3x4x256xf32>,
    } else {
    }
    %c0 = arith.constant 0 : index
    %c0_1 = arith.constant 0 : index
    %c0_2 = arith.constant 0 : index
    %3 = vector.load %arg3[%c0, %c0_1, %c0_2] : memref<1x4x256xf32, #tpu.memory_space<vmem>>, vector<1x4x256xf32>
    %4 = vector.shape_cast %3 : vector<1x4x256xf32> to vector<4x256xf32>
    %c0_3 = arith.constant 0 : index
    %c0_4 = arith.constant 0 : index
    %c0_5 = arith.constant 0 : index
    %5 = vector.load %arg4[%c0_3, %c0_4, %c0_5] : memref<1x1x256xi32, #tpu.memory_space<vmem>>, vector<1x1x256xi32>
    %6 = vector.shape_cast %5 : vector<1x1x256xi32> to vector<1x256xi32>
    %cst = arith.constant dense<0xFF800000> : vector<256xf32>
    %7 = vector.multi_reduction <maximumf>, %4, %cst [0] : vector<4x256xf32> to vector<256xf32>
    %8 = vector.shape_cast %7 : vector<256xf32> to vector<1x256xf32>
    %9 = vector.broadcast %8 : vector<1x256xf32> to vector<4x256xf32>
    %10 = arith.subf %4, %9 : vector<4x256xf32>
    %11 = math.exp %10 : vector<4x256xf32>
    %cst_6 = arith.constant dense<0.000000e+00> : vector<256xf32>
    %12 = vector.multi_reduction <add>, %11, %cst_6 [0] : vector<4x256xf32> to vector<256xf32>
    %13 = vector.shape_cast %12 : vector<256xf32> to vector<1x256xf32>
    %14 = tpu.reciprocal %13 : vector<1x256xf32> -> vector<1x256xf32>
    %15 = vector.broadcast %14 : vector<1x256xf32> to vector<4x256xf32>
    %16 = arith.mulf %11, %15 : vector<4x256xf32>
    %17 = tpu.iota {dimensions = array<i32: 0>} : vector<4x256xi32>
    %18 = vector.broadcast %6 : vector<1x256xi32> to vector<4x256xi32>
    %19 = arith.cmpi eq, %18, %17 : vector<4x256xi32>
    %20 = arith.extui %19 : vector<4x256xi1> to vector<4x256xi32>
    %21 = arith.sitofp %20 : vector<4x256xi32> to vector<4x256xf32>
    %22 = arith.mulf %16, %21 : vector<4x256xf32>
    %23 = arith.mulf %16, %16 : vector<4x256xf32>
    %c0_7 = arith.constant 0 : index
    %c0_8 = arith.constant 0 : index
    %c0_9 = arith.constant 0 : index
    %24 = vector.load %arg6[%c0_7, %c0_8, %c0_9] : memref<3x4x256xf32, #tpu.memory_space<vmem>>, vector<1x4x256xf32>
    %25 = vector.shape_cast %24 : vector<1x4x256xf32> to vector<4x256xf32>
    %26 = arith.addf %25, %22 : vector<4x256xf32>
    %c0_10 = arith.constant 0 : index
    %c0_11 = arith.constant 0 : index
    %c0_12 = arith.constant 0 : index
    %27 = vector.load %arg6[%c0_10, %c0_11, %c0_12] : memref<3x4x256xf32, #tpu.memory_space<vmem>>, vector<1x4x256xf32>
    %28 = vector.shape_cast %27 : vector<1x4x256xf32> to vector<4x256xf32>
    %29 = vector.shape_cast %26 : vector<4x256xf32> to vector<1x4x256xf32>
    tpu.vector_store %arg6[%c0_10, %c0_11, %c0_12], %29 {strides = array<i32>} : memref<3x4x256xf32, #tpu.memory_space<vmem>>, vector<1x4x256xf32>,
    %c1 = arith.constant 1 : index
    %c0_13 = arith.constant 0 : index
    %c0_14 = arith.constant 0 : index
    %30 = vector.load %arg6[%c1, %c0_13, %c0_14] : memref<3x4x256xf32, #tpu.memory_space<vmem>>, vector<1x4x256xf32>
    %31 = vector.shape_cast %30 : vector<1x4x256xf32> to vector<4x256xf32>
    %32 = arith.addf %31, %21 : vector<4x256xf32>
    %c1_15 = arith.constant 1 : index
    %c0_16 = arith.constant 0 : index
    %c0_17 = arith.constant 0 : index
    %33 = vector.load %arg6[%c1_15, %c0_16, %c0_17] : memref<3x4x256xf32, #tpu.memory_space<vmem>>, vector<1x4x256xf32>
    %34 = vector.shape_cast %33 : vector<1x4x256xf32> to vector<4x256xf32>
    %35 = vector.shape_cast %32 : vector<4x256xf32> to vector<1x4x256xf32>
    tpu.vector_store %arg6[%c1_15, %c0_16, %c0_17], %35 {strides = array<i32>} : memref<3x4x256xf32, #tpu.memory_space<vmem>>, vector<1x4x256xf32>,
    %c2 = arith.constant 2 : index
    %c0_18 = arith.constant 0 : index
    %c0_19 = arith.constant 0 : index
    %36 = vector.load %arg6[%c2, %c0_18, %c0_19] : memref<3x4x256xf32, #tpu.memory_space<vmem>>, vector<1x4x256xf32>
    %37 = vector.shape_cast %36 : vector<1x4x256xf32> to vector<4x256xf32>
    %38 = arith.addf %37, %23 : vector<4x256xf32>
    %c2_20 = arith.constant 2 : index
    %c0_21 = arith.constant 0 : index
    %c0_22 = arith.constant 0 : index
    %39 = vector.load %arg6[%c2_20, %c0_21, %c0_22] : memref<3x4x256xf32, #tpu.memory_space<vmem>>, vector<1x4x256xf32>
    %40 = vector.shape_cast %39 : vector<1x4x256xf32> to vector<4x256xf32>
    %41 = vector.shape_cast %38 : vector<4x256xf32> to vector<1x4x256xf32>
    tpu.vector_store %arg6[%c2_20, %c0_21, %c0_22], %41 {strides = array<i32>} : memref<3x4x256xf32, #tpu.memory_space<vmem>>, vector<1x4x256xf32>,
    %c0_i32_23 = arith.constant 0 : i32
    %42 = arith.cmpi eq, %arg2, %c0_i32_23 : i32
    %43 = arith.extui %42 : i1 to i32
    %c0_i32_24 = arith.constant 0 : i32
    %44 = arith.cmpi ne, %43, %c0_i32_24 : i32
    scf.if %44 {
      %c0_25 = arith.constant 0 : index
      %c0_26 = arith.constant 0 : index
      %c0_27 = arith.constant 0 : index
      %45 = vector.load %arg6[%c0_25, %c0_26, %c0_27] : memref<3x4x256xf32, #tpu.memory_space<vmem>>, vector<3x4x256xf32>
      %cst_28 = arith.constant dense<0.000000e+00> : vector<3x4xf32>
      %46 = vector.multi_reduction <add>, %45, %cst_28 [2] : vector<3x4x256xf32> to vector<3x4xf32>
      %c0_29 = arith.constant 0 : index
      %c0_30 = arith.constant 0 : index
      %c0_31 = arith.constant 0 : index
      %c0_32 = arith.constant 0 : index
      %47 = vector.load %arg5[%c0_29, %c0_30, %c0_31, %c0_32] : memref<1x1x3x4xf32, #tpu.memory_space<vmem>>, vector<1x1x3x4xf32>
      %48 = vector.shape_cast %47 : vector<1x1x3x4xf32> to vector<3x4xf32>
      %49 = vector.shape_cast %46 : vector<3x4xf32> to vector<1x1x3x4xf32>
      tpu.vector_store %arg5[%c0_29, %c0_30, %c0_31, %c0_32], %49 {strides = array<i32>} : memref<1x1x3x4xf32, #tpu.memory_space<vmem>>, vector<1x1x3x4xf32>,
    } else {
    }
    return
  }
  func.func @transform_0(%arg0: i32, %arg1: i32, %arg2: i32) -> (i32, i32, i32) {
    %c1_i32 = arith.constant 1 : i32
    %0 = arith.muli %arg1, %c1_i32 : i32
    %1 = arith.addi %0, %arg2 : i32
    %c0_i32 = arith.constant 0 : i32
    %2 = arith.minsi %1, %c0_i32 : i32
    %c0_i32_0 = arith.constant 0 : i32
    %c0_i32_1 = arith.constant 0 : i32
    return %arg0, %c0_i32_0, %2 : i32, i32, i32
  }
  func.func @transform_1(%arg0: i32, %arg1: i32, %arg2: i32) -> (i32, i32, i32) {
    %c1_i32 = arith.constant 1 : i32
    %0 = arith.muli %arg1, %c1_i32 : i32
    %1 = arith.addi %0, %arg2 : i32
    %c0_i32 = arith.constant 0 : i32
    %2 = arith.minsi %1, %c0_i32 : i32
    %c0_i32_0 = arith.constant 0 : i32
    %c0_i32_1 = arith.constant 0 : i32
    return %arg0, %c0_i32_0, %2 : i32, i32, i32
  }
  func.func @transform_2(%arg0: i32, %arg1: i32, %arg2: i32) -> (i32, i32, i32, i32) {
    %c0_i32 = arith.constant 0 : i32
    %c0_i32_0 = arith.constant 0 : i32
    %c0_i32_1 = arith.constant 0 : i32
    return %arg0, %arg1, %c0_i32, %c0_i32_0 : i32, i32, i32, i32
  }
}

</mosaic_0001>

<llo_original>
// kernel: dice_loss.1
$region0: #{dice_loss.1}
  #allocation0 [shape = 'u32[]', space=smem, size = 0x4, offset = 0x4, fixed_abs, tag = 'smem constant byte address 0x4 - core index']
  #allocation1 [shape = 'u32[144,128]{1,0:T(1,128)}', space=vmem, size = 0x12000, scoped, tag = 'internal scratch']
  #allocation2 [shape = 'f32[3,4,256]{2,1,0:T(4,128)}', space=vmem, size = 0x3000, scoped, tag = 'scratch operand']
  %s0 = inlined_call_operand.vmem [shape: f32[2,4,256], index: 0, kind: input, shape index: {}]
  %s1 = inlined_call_operand.vmem [shape: s32[2,1,256], index: 1, kind: input, shape index: {}]
  %s2 = inlined_call_operand.vmem [shape: f32[2,1,3,4], index: 2, kind: output, shape index: {}]
  %s3 = sld [smem:[#allocation0]]
  $region49: #{dice_loss.1} parent=0
    _
  %s5 = ssub.s32 1, %s3
  %s6 = scalar_select 0, %s5, %s3
  loop: start=0, step=1, limit=4
  $region2: #{dice_loss.1} parent=0 // loop_pre_header
    _
  $region3: #{dice_loss.1} parent=0 // loop_header
    %s8 = sphi 0, %s12
    %p9 = scmp.ge.s32.totalorder %s8, 4
    %s15 = sphi 0, %s34
    %s16 = sphi 0, %s30
    %s17 = sphi 0, %s26
    %s18 = sphi 0, %s15
    %s19 = sphi 0, %s16
    %s20 = sphi 0, %s17
    %s21 = sphi 0, %s18
    %s22 = sphi 0, %s19
    %s23 = sphi 0, %s20
    %s45 = sphi 0, %s47
    %s48 = sphi 0, %s45
    %s49 = sphi 0, %s48
    %s65 = sphi 0, %s49
    %s79 = sphi 0, %s81
    %s82 = sphi 0, %s79
    %s83 = sphi 0, %s82
    %s99 = sphi 0, %s83
    %s107 = sphi 0, %s109
    %s110 = sphi 0, %s107
    %s111 = sphi 0, %s110
    %s127 = sphi 0, %s111
  $region4: #{dice_loss.1} parent=0 // loop_header_branch
    %11 = sbr.rel (%p9) target = $region8
  $region5: #{dice_loss.1} parent=0 // loop_body
    %s13 = ssub.s32 %s8, 1
    %s14 = ssub.s32 %s8, 2
    %s24 = sadd.s32 1, %s17
    %p25 = scmp.ge.s32.totalorder %s24, 1
    %s26 = scalar_select %p25, 0, %s24
    %s27 = sadd.s32 1, %s16
    %s28 = scalar_select %p25, %s27, %s16
    %p29 = scmp.ge.s32.totalorder %s28, 1
    %s30 = scalar_select %p29, 0, %s28
    %s31 = sadd.s32 1, %s15
    %s32 = scalar_select %p29, %s31, %s15
    %p33 = scmp.ge.s32.totalorder %s32, 2
    %s34 = scalar_select %p33, 0, %s32
    %s35 = sadd.s32 %s16, %s17
    %p36 = scmp.lt.s32.totalorder %s35, 0
    %s37 = scalar_select %p36, %s35, 0
    %s38 = sadd.s32 %s30, %s26
    %p39 = scmp.lt.s32.totalorder %s38, 0
    %s40 = scalar_select %p39, %s38, 0
    %s41 = ssub.s32 %s15, %s34
    %s42 = ssub.s32 %s37, %s40
    %s43 = sor.u32 %s41, %s42
    %p44 = scmp.eq.s32.totalorder %s43, 0
    %s46 = sadd.s32 %s45, 1
    %s47 = scalar_select %p44, %s45, %s46
    %p50 = pneg %p44
    %p51 = scmp.eq.s32.totalorder %s8, 1
    %p52 = por %p50, %p51
    %p53 = scmp.ne.s32.totalorder %s45, %s48
    %p54 = scmp.eq.s32.totalorder %s8, 0
    %p55 = por %p53, %p54
    %p56 = scmp.ne.s32.totalorder %s45, %s48
    %p57 = scmp.eq.s32.totalorder %s13, 1
    %p58 = por %p56, %p57
    %p59 = scmp.ne.s32.totalorder %s48, %s49
    %p60 = scmp.eq.s32.totalorder %s13, 0
    %p61 = por %p59, %p60
    %p62 = scmp.ne.s32.totalorder %s48, %s49
    %p63 = scmp.eq.s32.totalorder %s14, 1
    %p64 = por %p62, %p63
    %p66 = scmp.ne.s32.totalorder %s49, %s65
    %p67 = scmp.eq.s32.totalorder %s14, 0
    %p68 = por %p66, %p67
    %s69 = sadd.s32 %s16, %s17
    %p70 = scmp.lt.s32.totalorder %s69, 0
    %s71 = scalar_select %p70, %s69, 0
    %s72 = sadd.s32 %s30, %s26
    %p73 = scmp.lt.s32.totalorder %s72, 0
    %s74 = scalar_select %p73, %s72, 0
    %s75 = ssub.s32 %s15, %s34
    %s76 = ssub.s32 %s71, %s74
    %s77 = sor.u32 %s75, %s76
    %p78 = scmp.eq.s32.totalorder %s77, 0
    %s80 = sadd.s32 %s79, 1
    %s81 = scalar_select %p78, %s79, %s80
    %p84 = pneg %p78
    %p85 = scmp.eq.s32.totalorder %s8, 1
    %p86 = por %p84, %p85
    %p87 = scmp.ne.s32.totalorder %s79, %s82
    %p88 = scmp.eq.s32.totalorder %s8, 0
    %p89 = por %p87, %p88
    %p90 = scmp.ne.s32.totalorder %s79, %s82
    %p91 = scmp.eq.s32.totalorder %s13, 1
    %p92 = por %p90, %p91
    %p93 = scmp.ne.s32.totalorder %s82, %s83
    %p94 = scmp.eq.s32.totalorder %s13, 0
    %p95 = por %p93, %p94
    %p96 = scmp.ne.s32.totalorder %s82, %s83
    %p97 = scmp.eq.s32.totalorder %s14, 1
    %p98 = por %p96, %p97
    %p100 = scmp.ne.s32.totalorder %s83, %s99
    %p101 = scmp.eq.s32.totalorder %s14, 0
    %p102 = por %p100, %p101
    %s103 = ssub.s32 %s15, %s34
    %s104 = ssub.s32 %s16, %s30
    %s105 = sor.u32 %s103, %s104
    %p106 = scmp.eq.s32.totalorder %s105, 0
    %s108 = sadd.s32 %s107, 1
    %s109 = scalar_select %p106, %s107, %s108
    %p112 = pneg %p106
    %p113 = scmp.eq.s32.totalorder %s8, 1
    %p114 = por %p112, %p113
    %p115 = scmp.ne.s32.totalorder %s107, %s110
    %p116 = scmp.eq.s32.totalorder %s8, 0
    %p117 = por %p115, %p116
    %p118 = scmp.ne.s32.totalorder %s107, %s110
    %p119 = scmp.eq.s32.totalorder %s13, 1
    %p120 = por %p118, %p119
    %p121 = scmp.ne.s32.totalorder %s110, %s111
    %p122 = scmp.eq.s32.totalorder %s13, 0
    %p123 = por %p121, %p122
    %p124 = scmp.ne.s32.totalorder %s110, %s111
    %p125 = scmp.eq.s32.totalorder %s14, 1
    %p126 = por %p124, %p125
    %p128 = scmp.ne.s32.totalorder %s111, %s127
    %p129 = scmp.eq.s32.totalorder %s14, 0
    %p130 = por %p128, %p129
    %p131 = scmp.le.s32.totalorder 1, %s8
    %p132 = scmp.lt.s32.totalorder %s8, 3
    %p133 = pnand %p131, %p132
    %p134 = pneg %p133
    // Predicated region
    $region9: #{dice_loss.1} parent=5 // pred_check
      _
    $region10: #{dice_loss.1} parent=5 // pred_check_branch
      %136 = sbr.rel (%p133) target = $region12
    $region11: #{dice_loss.1} parent=5 // pred_region
      %s137 = ssub.s32 %s8, 1
    $region12: #{dice_loss.1} parent=5 // pred_fallthru
      _
    %p138 = scmp.lt.s32.totalorder %s8, 2
    // Predicated region
    $region13: #{dice_loss.1} parent=5 // pred_check
      %p139 = pneg %p138
    $region14: #{dice_loss.1} parent=5 // pred_check_branch
      %141 = sbr.rel (%p139) target = $region16
    $region15: #{dice_loss.1} parent=5 // pred_region
      // Predicated region
      $region17: #{dice_loss.1} parent=15 // pred_check
        %p142 = pneg %p55
      $region18: #{dice_loss.1} parent=15 // pred_check_branch
        %144 = sbr.rel (%p142) target = $region20
      $region19: #{dice_loss.1} parent=15 // pred_region
        %s145 = sadd.s32 %s16, %s17
        %p146 = scmp.lt.s32.totalorder %s145, 0
        %s147 = scalar_select %p146, %s145, 0
        %s148 = smul.u32 2, %s147
        %p149 = scmp.lt.s32.totalorder %s15, 1
        %s150 = scalar_select %p149, %s15, 1
        %p151 = scmp.lt.s32.totalorder %s148, 1
        %s152 = scalar_select %p151, %s148, 1
        %s153 = smul.addr %s150, 2
        %s154 = sadd.s32 %s152, %s153
        %s155 = smul.addr %s154, 4
        %s156 = scalar_lea.vmem %s0, %s155
        %s157 = sadd.s32 %s16, %s17
        %p158 = scmp.lt.s32.totalorder %s157, 0
        %s159 = scalar_select %p158, %s157, 0
        %s160 = smul.u32 2, %s159
      $region20: #{dice_loss.1} parent=15 // pred_fallthru
        _
      // Predicated region
      $region21: #{dice_loss.1} parent=15 // pred_check
        %p161 = pneg %p89
      $region22: #{dice_loss.1} parent=15 // pred_check_branch
        %163 = sbr.rel (%p161) target = $region24
      $region23: #{dice_loss.1} parent=15 // pred_region
        %s164 = sadd.s32 %s16, %s17
        %p165 = scmp.lt.s32.totalorder %s164, 0
        %s166 = scalar_select %p165, %s164, 0
        %s167 = smul.u32 2, %s166
        %p168 = scmp.lt.s32.totalorder %s15, 1
        %s169 = scalar_select %p168, %s15, 1
        %p170 = scmp.lt.s32.totalorder %s167, 1
        %s171 = scalar_select %p170, %s167, 1
        %s172 = smul.addr %s169, 2
        %s173 = sadd.s32 %s171, %s172
        %s174 = scalar_lea.vmem %s1, %s173
        %s175 = sadd.s32 %s16, %s17
        %p176 = scmp.lt.s32.totalorder %s175, 0
        %s177 = scalar_select %p176, %s175, 0
        %s178 = smul.u32 2, %s177
      $region24: #{dice_loss.1} parent=15 // pred_fallthru
        _
    $region16: #{dice_loss.1} parent=5 // pred_fallthru
      _
    %p179 = scmp.le.s32.totalorder 1, %s8
    %p180 = scmp.lt.s32.totalorder %s8, 3
    %p181 = pnand %p179, %p180
    %p182 = pneg %p181
    // Predicated region
    $region25: #{dice_loss.1} parent=5 // pred_check
      _
    $region26: #{dice_loss.1} parent=5 // pred_check_branch
      %184 = sbr.rel (%p181) target = $region28
    $region27: #{dice_loss.1} parent=5 // pred_region
      %s185 = ssub.s32 %s8, 1
      %s186 = sadd.s32 %s19, %s20
      %p187 = scmp.lt.s32.totalorder %s186, 0
      %s188 = scalar_select %p187, %s186, 0
      %s189 = smul.u32 2, %s188
      %p190 = scmp.lt.s32.totalorder %s18, 1
      %s191 = scalar_select %p190, %s18, 1
      %p192 = scmp.lt.s32.totalorder %s189, 1
      %s193 = scalar_select %p192, %s189, 1
      %s194 = smul.addr %s191, 2
      %s195 = sadd.s32 %s193, %s194
      %s196 = smul.addr %s195, 4
      %s197 = scalar_lea.vmem %s0, %s196
      %p198 = pneg %p61
      %p199 = pneg %p58
      %s200 = sadd.s32 %s19, %s20
      %p201 = scmp.lt.s32.totalorder %s200, 0
      %s202 = scalar_select %p201, %s200, 0
      %s203 = smul.u32 2, %s202
      %p204 = scmp.lt.s32.totalorder %s18, 1
      %s205 = scalar_select %p204, %s18, 1
      %p206 = scmp.lt.s32.totalorder %s203, 1
      %s207 = scalar_select %p206, %s203, 1
      %s208 = smul.addr %s205, 2
      %s209 = sadd.s32 %s207, %s208
      %s210 = scalar_lea.vmem %s1, %s209
      %p211 = pneg %p95
      %p212 = pneg %p92
      %p213 = pneg %p123
      %p214 = pneg %p120
      %p215 = scmp.lt.s32.totalorder %s18, 1
      %s216 = scalar_select %p215, %s18, 1
      %p217 = scmp.lt.s32.totalorder %s19, 0
      %s218 = scalar_select %p217, %s19, 0
      %s219 = sadd.s32 %s218, %s216
      %s220 = smul.addr %s219, 4
      %s221 = scalar_lea.vmem %s2, %s220
      %s222 = sadd.s32 %s19, %s20
      %p223 = scmp.lt.s32.totalorder %s222, 0
      %s224 = scalar_select %p223, %s222, 0
      %s225 = smul.u32 2, %s224
      %p226 = scmp.lt.s32.totalorder %s18, 1
      %s227 = scalar_select %p226, %s18, 1
      %p228 = scmp.lt.s32.totalorder %s225, 1
      %s229 = scalar_select %p228, %s225, 1
      %s230 = smul.addr %s227, 2
      %s231 = sadd.s32 %s229, %s230
      %s232 = smul.addr %s231, 4
      %s233 = scalar_lea.vmem %s0, %s232
      %s234 = sadd.s32 %s19, %s20
      %p235 = scmp.lt.s32.totalorder %s234, 0
      %s236 = scalar_select %p235, %s234, 0
      %s237 = smul.u32 2, %s236
      %s238 = sadd.s32 %s19, %s20
      %p239 = scmp.lt.s32.totalorder %s238, 0
      %s240 = scalar_select %p239, %s238, 0
      %s241 = smul.u32 2, %s240
      %p242 = scmp.lt.s32.totalorder %s18, 1
      %s243 = scalar_select %p242, %s18, 1
      %p244 = scmp.lt.s32.totalorder %s241, 1
      %s245 = scalar_select %p244, %s241, 1
      %s246 = smul.addr %s243, 2
      %s247 = sadd.s32 %s245, %s246
      %s248 = scalar_lea.vmem %s1, %s247
      %s249 = sadd.s32 %s19, %s20
      %p250 = scmp.lt.s32.totalorder %s249, 0
      %s251 = scalar_select %p250, %s249, 0
      %s252 = smul.u32 2, %s251
      %p253 = scmp.lt.s32.totalorder %s18, 1
      %s254 = scalar_select %p253, %s18, 1
      %p255 = scmp.lt.s32.totalorder %s19, 0
      %s256 = scalar_select %p255, %s19, 0
      %s257 = sadd.s32 %s256, %s254
      %s258 = smul.addr %s257, 4
      %s259 = scalar_lea.vmem %s2, %s258
      %p260 = scmp.eq.s32.totalorder %s20, 0
      // Predicated region
      $region29: #{dice_loss.1} parent=27 // pred_check
        %p261 = pneg %p260
      $region30: #{dice_loss.1} parent=27 // pred_check_branch
        %263 = sbr.rel (%p261) target = $region32
      $region31: #{dice_loss.1} parent=27 // pred_region
        %264 = vst [vmem:[#allocation2] sm:$0xff] 0.0
        %265 = vst [vmem:[#allocation2 + $0x8] sm:$0xff] 0.0
        %266 = vst [vmem:[#allocation2 + $0x10] sm:$0xff] 0.0
      $region32: #{dice_loss.1} parent=27 // pred_fallthru
        _
      %v267 = vld [vmem:[%s233] sm:$0xff]
      %v268 = vld [vmem:[%s248] sm:$0x3]
      %v270 = vcombine.high %v267, %v267
      %vm272 = vcmask 1043456
      %v273 = vsel %vm272, %v267, -inf
      %v274 = vrot.slane %v273, 4
      %v275 = vmax.f32 %v273, %v274
      %v276 = vrot.slane %v275, 2
      %v277 = vmax.f32 %v275, %v276
      %v278 = vrot.slane %v277, 1
      %v279 = vmax.f32 %v277, %v278
      %v280 = vsel %vm272, %v270, -inf
      %v281 = vrot.slane %v280, 4
      %v282 = vmax.f32 %v280, %v281
      %v283 = vrot.slane %v282, 2
      %v284 = vmax.f32 %v282, %v283
      %v285 = vrot.slane %v284, 1
      %v286 = vmax.f32 %v284, %v285
      %v289 = vcombine.low %v279, %v286
      %v291 = vsub.f32 %v267, %v289
      %v292 = vmul.f32 %v291, 1.442695
      %v293 = vpow.pop %v292
      %v295 = vcombine.high %v293, %v293
      %v297 = vsel %vm272, %v293, 0.0
      %v298 = vrot.slane %v297, 4
      %v299 = vadd.f32 %v297, %v298
      %v300 = vrot.slane %v299, 2
      %v301 = vadd.f32 %v299, %v300
      %v302 = vrot.slane %v301, 1
      %v303 = vadd.f32 %v301, %v302
      %v304 = vsel %vm272, %v295, 0.0
      %v305 = vrot.slane %v304, 4
      %v306 = vadd.f32 %v304, %v305
      %v307 = vrot.slane %v306, 2
      %v308 = vadd.f32 %v306, %v307
      %v309 = vrot.slane %v308, 1
      %v310 = vadd.f32 %v308, %v309
      %v311 = vrcp.pop %v303
      %v312 = vrcp.pop %v310
      %v315 = vcombine.low %v311, %v312
      %v317 = vmul.f32 %v293, %v315
      %v318 = vlaneseq
      %v319 = vshrl.u32 %v318, 7
      %v320 = vlaneseq
      %v321 = vshrl.u32 %v320, 7
      %v322 = vsub.s32 0, %v321
      %v323 = vrot.slane %v268, %v322
      %v324 = vlaneseq
      %v325 = vshrl.u32 %v324, 7
      %v326 = vsub.s32 1, %v325
      %v327 = vrot.slane %v268, %v326
      %vm328 = vcmp.eq.s32.totalorder %v323, %v319
      %vm329 = vcmp.eq.s32.totalorder %v327, %v319
      %v330 = vsel %vm328, 1, 0
      %v331 = vsel %vm329, 1, 0
      %v332 = vcvt.s32.f32 %v330
      %v333 = vcvt.s32.f32 %v331
      %v336 = vcombine.low %v332, %v333
      %v338 = vmul.f32 %v317, %v336
      %v339 = vmul.f32 %v317, %v317
      %v340 = vld [vmem:[#allocation2] sm:$0xff]
      %v341 = vadd.f32 %v340, %v338
      %342 = vst [vmem:[#allocation2] sm:$0xff] %v341
      %s343 = scalar_lea.vmem [#allocation2], 8
      %v344 = vld [vmem:[%s343] sm:$0xff]
      %v345 = vadd.f32 %v344, %v336
      %346 = vst [vmem:[%s343] sm:$0xff] %v345
      %s347 = scalar_lea.vmem [#allocation2], 16
      %v348 = vld [vmem:[%s347] sm:$0xff]
      %v349 = vadd.f32 %v348, %v339
      %350 = vst [vmem:[%s347] sm:$0xff] %v349
      // Predicated region
      $region33: #{dice_loss.1} parent=27 // pred_check
        %p351 = pneg %p260
      $region34: #{dice_loss.1} parent=27 // pred_check_branch
        %353 = sbr.rel (%p351) target = $region36
      $region35: #{dice_loss.1} parent=27 // pred_region
        %v354 = vld [vmem:[#allocation2] sm:$0xff]
        %v355 = vld [vmem:[#allocation2 + $0x8] sm:$0xff]
        %v356 = vld [vmem:[#allocation2 + $0x10] sm:$0xff]
        %v360 = vcombine.high %v354, %v354
        %v361 = vcombine.high %v355, %v355
        %v362 = vcombine.high %v356, %v356
        %v366 = vsel %vm272, %v354, 0.0
        %v367 = vsel %vm272, %v360, 0.0
        %v368 = vadd.f32 %v366, %v367
        %369 = vadd.xlane.f32.xlu0 %v368
        %v370 = vpop.xlane.xlu0 %369
        %v371 = vsel %vm272, %v355, 0.0
        %v372 = vsel %vm272, %v361, 0.0
        %v373 = vadd.f32 %v371, %v372
        %374 = vadd.xlane.f32.xlu0 %v373
        %v375 = vpop.xlane.xlu0 %374
        %v376 = vsel %vm272, %v356, 0.0
        %v377 = vsel %vm272, %v362, 0.0
        %v378 = vadd.f32 %v376, %v377
        %379 = vadd.xlane.f32.xlu0 %v378
        %v380 = vpop.xlane.xlu0 %379
        %v384 = vlaneseq
        %v385 = vand.u32 %v384, 127
        %v386 = vlaneseq
        %v387 = vshrl.u32 %v386, 7
        %v388 = vsub.s32 %v385, %v387
        %v389 = vrot.slane %v370, %v388
        %v390 = vlaneseq
        %v391 = vshrl.u32 %v390, 7
        %v392 = vsub.s32 %v385, %v391
        %v393 = vrot.slane %v375, %v392
        %v394 = vlaneseq
        %v395 = vshrl.u32 %v394, 7
        %v396 = vsub.s32 %v385, %v395
        %v397 = vrot.slane %v380, %v396
        %vm398 = vcmask 1041409
        %v399 = vsel %vm398, %v393, %v389
        %vm400 = vcmask 1042434
        %v401 = vsel %vm400, %v397, %v399
        %vm403 = vcmask 26624
        %404 = vst.msk [vmem:[%s259] sm:$0x7] %vm403, %v401
      $region36: #{dice_loss.1} parent=27 // pred_fallthru
        _
      %p405 = scmp.lt.s32.totalorder %s18, 1
      %s406 = scalar_select %p405, %s18, 1
      %p407 = scmp.lt.s32.totalorder %s19, 0
      %s408 = scalar_select %p407, %s19, 0
      %s409 = sadd.s32 %s408, %s406
      %s410 = smul.addr %s409, 4
      %s411 = scalar_lea.vmem %s2, %s410
      // Predicated region
      $region37: #{dice_loss.1} parent=27 // pred_check
        %p412 = pneg %p120
      $region38: #{dice_loss.1} parent=27 // pred_check_branch
        %414 = sbr.rel (%p412) target = $region40
      $region39: #{dice_loss.1} parent=27 // pred_region
        _
      $region40: #{dice_loss.1} parent=27 // pred_fallthru
        _
    $region28: #{dice_loss.1} parent=5 // pred_fallthru
      _
    %p415 = scmp.le.s32.totalorder 2, %s8
    // Predicated region
    $region41: #{dice_loss.1} parent=5 // pred_check
      %p416 = pneg %p415
    $region42: #{dice_loss.1} parent=5 // pred_check_branch
      %418 = sbr.rel (%p416) target = $region44
    $region43: #{dice_loss.1} parent=5 // pred_region
      %s419 = ssub.s32 %s8, 2
      // Predicated region
      $region45: #{dice_loss.1} parent=43 // pred_check
        %p420 = pneg %p126
      $region46: #{dice_loss.1} parent=43 // pred_check_branch
        %422 = sbr.rel (%p420) target = $region48
      $region47: #{dice_loss.1} parent=43 // pred_region
        %p423 = scmp.lt.s32.totalorder %s21, 1
        %s424 = scalar_select %p423, %s21, 1
        %p425 = scmp.lt.s32.totalorder %s22, 0
        %s426 = scalar_select %p425, %s22, 0
        %s427 = sadd.s32 %s426, %s424
        %s428 = smul.addr %s427, 4
        %s429 = scalar_lea.vmem %s2, %s428
      $region48: #{dice_loss.1} parent=43 // pred_fallthru
        _
    $region44: #{dice_loss.1} parent=5 // pred_fallthru
      _
  $region6: #{dice_loss.1} parent=0 // loop_footer
    %s12 = sadd.s32 1, %s8
  $region7: #{dice_loss.1} parent=0 // loop_footer_branch
    %7 = sbr.rel target = $region3
  $region8: #{dice_loss.1} parent=0 // loop_exit
    _

</llo_original>
